<compile_context>
chip_gen: v5e
topology: v5e:2x2
jax: 0.10.0
libtpu: 0.0.40
codegen_flags: <defaults>
</compile_context>

<pallas_src>
import functools

import jax
import jax.numpy as jnp
from jax.experimental import pallas as pl
from jax.experimental.pallas import tpu as pltpu


def _round_up(x, m):
    return ((x + m - 1) // m) * m


def _pow_small_int(u, gamma):
    """(1-pt)**gamma. Uses repeated VPU multiplies for small integer gamma."""
    g = float(gamma)
    gi = int(g)
    if g == gi and 0 <= gi <= 8:
        if gi == 0:
            return jnp.ones_like(u)
        r = u
        for _ in range(gi - 1):
            r = r * u
        return r
    return u ** g  # fallback: exp(g*log(u)) on the EUP


def _choose_tile_rows(n, c, itemsize, sublane):
    """Pick the largest row tile that keeps the working set well inside the
    default scoped-VMEM limit of every TPU generation (v5e: 16 MiB)."""
    budget = 12 * 1024 * 1024
    # double-buffered logits input + ~3 live f32 working tiles per row
    bytes_per_row = c * (2 * itemsize + 3 * 4)
    tn = budget // max(bytes_per_row, 1)
    tn = int(max(sublane, min(tn, 2048)))
    tn = (tn // sublane) * sublane
    return max(sublane, tn)


def _focal_loss_kernel(logits_ref, targets_ref, out_ref, *,
                       alpha, gamma, n_rows, tile_rows):
    logits = logits_ref[...].astype(jnp.float32)            # (TN, C) f32
    tgt = targets_ref[...]                                   # (TN, 1) int32

    # one-hot mask for the target class of each row (VPU compare, no gather)
    col_ids = jax.lax.broadcasted_iota(jnp.int32, logits.shape, 1)
    onehot = (col_ids == tgt).astype(jnp.float32)             # (TN, C)

    # numerically stable cross-entropy; `shifted` reused for both terms
    row_max = jnp.max(logits, axis=-1, keepdims=True)          # (TN, 1)
    shifted = logits - row_max                                  # (TN, C)
    sum_exp = jnp.sum(jnp.exp(shifted), axis=-1, keepdims=True)
    tgt_shifted = jnp.sum(shifted * onehot, axis=-1, keepdims=True)
    ce = jnp.log(sum_exp) - tgt_shifted                         # (TN, 1) >= 0

    pt = jnp.exp(-ce)
    u = 1.0 - pt
    focal = alpha * _pow_small_int(u, gamma) * ce               # (TN, 1)

    # mask rows past the true batch size (padded last tile)
    row_start = pl.program_id(0) * tile_rows
    row_ids = jax.lax.broadcasted_iota(jnp.int32, focal.shape, 0) + row_start
    focal = jnp.where(row_ids < n_rows, focal, 0.0)

    # per-tile partial sum; mean is finished outside the kernel
    out_ref[...] = jnp.sum(focal).reshape(1, 1, 1)


def focal_loss(logits, targets, alpha=2.0, gamma=3.0, tile_rows=None):
    """logits: (N, C) float (f32 or bf16); targets: (N,) int class indices.

    Returns the scalar mean focal loss (matches the PyTorch module with
    reduction='mean').
    """
    n, c = logits.shape
    itemsize = jnp.dtype(logits.dtype).itemsize
    sublane = {4: 8, 2: 16, 1: 32}.get(itemsize, 8)

    if tile_rows is None:
        tile_rows = _choose_tile_rows(n, c, itemsize, sublane)
    tile_rows = min(int(tile_rows), _round_up(n, sublane))
    tile_rows = max(sublane, _round_up(tile_rows, sublane))

    num_tiles = pl.cdiv(n, tile_rows)
    targets2d = targets.astype(jnp.int32).reshape(n, 1)

    kernel = functools.partial(
        _focal_loss_kernel, alpha=float(alpha), gamma=float(gamma),
        n_rows=n, tile_rows=tile_rows)

    partials = pl.pallas_call(
        kernel,
        out_shape=jax.ShapeDtypeStruct((num_tiles, 1, 1), jnp.float32),
        grid=(num_tiles,),
        in_specs=[
            pl.BlockSpec((tile_rows, c), lambda i: (i, 0)),
            pl.BlockSpec((tile_rows, 1), lambda i: (i, 0)),
        ],
        out_specs=pl.BlockSpec((1, 1, 1), lambda i: (i, 0, 0)),
        compiler_params=pltpu.CompilerParams(
            dimension_semantics=("parallel",)),
    )(logits, targets2d)

    # reduction='mean'
    return jnp.sum(partials) / n


def focal_loss_ref(logits, targets, alpha=2.0, gamma=3.0):
    """Pure-JAX reference matching the PyTorch module."""
    logp = jax.nn.log_softmax(logits.astype(jnp.float32), axis=-1)
    ce = -jnp.take_along_axis(
        logp, targets[:, None].astype(jnp.int32), axis=-1)[:, 0]
    pt = jnp.exp(-ce)
    return jnp.mean(alpha * (1.0 - pt) ** gamma * ce)


if __name__ == "__main__":
    key = jax.random.PRNGKey(0)
    k1, k2, k3, k4 = jax.random.split(key, 4)

    # Case 1: small f32 batch (single tile).
    N1, C1 = 8, 32
    logits1 = jax.random.normal(k1, (N1, C1), dtype=jnp.float32) * 2.0
    targets1 = jax.random.randint(k2, (N1,), 0, C1, dtype=jnp.int32)
    loss1 = focal_loss(logits1, targets1)
    jax.block_until_ready(loss1)
    ref1 = focal_loss_ref(logits1, targets1)
    assert jnp.allclose(loss1, ref1, rtol=1e-5, atol=1e-5), (loss1, ref1)

    # Case 2: bf16 logits, ragged batch with a forced small tile so the grid,
    # pipelining, and last-tile row masking are all exercised.
    N2, C2 = 50, 32
    logits2 = (jax.random.normal(k3, (N2, C2), dtype=jnp.float32)
               * 2.0).astype(jnp.bfloat16)
    targets2 = jax.random.randint(k4, (N2,), 0, C2, dtype=jnp.int32)
    loss2 = focal_loss(logits2, targets2, tile_rows=16)
    jax.block_until_ready(loss2)
    ref2 = focal_loss_ref(logits2.astype(jnp.float32), targets2)
    assert jnp.allclose(loss2, ref2, rtol=1e-4, atol=1e-4), (loss2, ref2)

    print("KERNEL_OK")
</pallas_src>

<mosaic_0001>
module attributes {stable_mosaic.version = 11 : i64} {
  func.func @_focal_loss_kernel(%arg0: i32, %arg1: memref<8x32xf32, #tpu.memory_space<vmem>>, %arg2: memref<8x1xi32, #tpu.memory_space<vmem>>, %arg3: memref<1x1x1xf32, #tpu.memory_space<vmem>>) attributes {dimension_semantics = [#tpu.dimension_semantics<parallel>], iteration_bounds = array<i64: 1>, scalar_prefetch = 0 : i64, scratch_operands = 0 : i64, tpu.core_type = #tpu.core_type<tc>, window_params = [{transform_indices = @transform_0, window_bounds = array<i64: 8, 32>}, {transform_indices = @transform_1, window_bounds = array<i64: 8, 1>}, {transform_indices = @transform_2, window_bounds = array<i64: 1, 1, 1>}]} {
    %c0 = arith.constant 0 : index
    %c0_0 = arith.constant 0 : index
    %0 = vector.load %arg1[%c0, %c0_0] : memref<8x32xf32, #tpu.memory_space<vmem>>, vector<8x32xf32>
    %c0_1 = arith.constant 0 : index
    %c0_2 = arith.constant 0 : index
    %1 = vector.load %arg2[%c0_1, %c0_2] : memref<8x1xi32, #tpu.memory_space<vmem>>, vector<8x1xi32>
    %2 = tpu.iota {dimensions = array<i32: 1>} : vector<8x32xi32>
    %3 = vector.broadcast %1 : vector<8x1xi32> to vector<8x32xi32>
    %4 = arith.cmpi eq, %2, %3 : vector<8x32xi32>
    %5 = arith.extui %4 : vector<8x32xi1> to vector<8x32xi32>
    %6 = arith.sitofp %5 : vector<8x32xi32> to vector<8x32xf32>
    %cst = arith.constant dense<0xFF800000> : vector<8xf32>
    %7 = vector.multi_reduction <maximumf>, %0, %cst [1] : vector<8x32xf32> to vector<8xf32>
    %8 = vector.shape_cast %7 : vector<8xf32> to vector<8x1xf32>
    %9 = vector.broadcast %8 : vector<8x1xf32> to vector<8x32xf32>
    %10 = arith.subf %0, %9 : vector<8x32xf32>
    %11 = math.exp %10 : vector<8x32xf32>
    %cst_3 = arith.constant dense<0.000000e+00> : vector<8xf32>
    %12 = vector.multi_reduction <add>, %11, %cst_3 [1] : vector<8x32xf32> to vector<8xf32>
    %13 = vector.shape_cast %12 : vector<8xf32> to vector<8x1xf32>
    %14 = arith.mulf %10, %6 : vector<8x32xf32>
    %cst_4 = arith.constant dense<0.000000e+00> : vector<8xf32>
    %15 = vector.multi_reduction <add>, %14, %cst_4 [1] : vector<8x32xf32> to vector<8xf32>
    %16 = vector.shape_cast %15 : vector<8xf32> to vector<8x1xf32>
    %17 = math.log %13 : vector<8x1xf32>
    %18 = arith.subf %17, %16 : vector<8x1xf32>
    %cst_5 = arith.constant 0.000000e+00 : f32
    %19 = vector.broadcast %cst_5 : f32 to vector<8x1xf32>
    %20 = arith.subf %19, %18 : vector<8x1xf32>
    %21 = math.exp %20 : vector<8x1xf32>
    %cst_6 = arith.constant 1.000000e+00 : f32
    %22 = vector.broadcast %cst_6 : f32 to vector<8x1xf32>
    %23 = arith.subf %22, %21 : vector<8x1xf32>
    %24 = arith.mulf %23, %23 : vector<8x1xf32>
    %25 = arith.mulf %24, %23 : vector<8x1xf32>
    %cst_7 = arith.constant 2.000000e+00 : f32
    %26 = vector.broadcast %cst_7 : f32 to vector<8x1xf32>
    %27 = arith.mulf %26, %25 : vector<8x1xf32>
    %28 = arith.mulf %27, %18 : vector<8x1xf32>
    %c8_i32 = arith.constant 8 : i32
    %29 = arith.muli %arg0, %c8_i32 : i32
    %30 = tpu.iota {dimensions = array<i32: 0>} : vector<8x1xi32>
    %31 = vector.broadcast %29 : i32 to vector<8x1xi32>
    %32 = arith.addi %30, %31 : vector<8x1xi32>
    %c8_i32_8 = arith.constant 8 : i32
    %33 = vector.broadcast %c8_i32_8 : i32 to vector<8x1xi32>
    %34 = arith.cmpi slt, %32, %33 : vector<8x1xi32>
    %cst_9 = arith.constant 0.000000e+00 : f32
    %35 = vector.broadcast %cst_9 : f32 to vector<8x1xf32>
    %36 = arith.select %34, %28, %35 : vector<8x1xi1>, vector<8x1xf32>
    %37 = vector.shape_cast %36 : vector<8x1xf32> to vector<1x8x1xf32>
    %cst_10 = arith.constant dense<0.000000e+00> : vector<1xf32>
    %38 = vector.multi_reduction <add>, %37, %cst_10 [1, 2] : vector<1x8x1xf32> to vector<1xf32>
    %39 = vector.shape_cast %38 : vector<1xf32> to vector<1x1x1xf32>
    %40 = vector.extract %39[0, 0, 0] : f32 from vector<1x1x1xf32>
    %41 = vector.broadcast %40 : f32 to vector<1x1x1xf32>
    %c0_11 = arith.constant 0 : index
    %c0_12 = arith.constant 0 : index
    %c0_13 = arith.constant 0 : index
    %42 = vector.load %arg3[%c0_11, %c0_12, %c0_13] : memref<1x1x1xf32, #tpu.memory_space<vmem>>, vector<1x1x1xf32>
    tpu.vector_store %arg3[%c0_11, %c0_12, %c0_13], %41 {strides = array<i32>} : memref<1x1x1xf32, #tpu.memory_space<vmem>>, vector<1x1x1xf32>,
    return
  }
  func.func @transform_0(%arg0: i32) -> (i32, i32) {
    %c0_i32 = arith.constant 0 : i32
    %c0_i32_0 = arith.constant 0 : i32
    return %arg0, %c0_i32 : i32, i32
  }
  func.func @transform_1(%arg0: i32) -> (i32, i32) {
    %c0_i32 = arith.constant 0 : i32
    %c0_i32_0 = arith.constant 0 : i32
    return %arg0, %c0_i32 : i32, i32
  }
  func.func @transform_2(%arg0: i32) -> (i32, i32, i32) {
    %c0_i32 = arith.constant 0 : i32
    %c0_i32_0 = arith.constant 0 : i32
    %c0_i32_1 = arith.constant 0 : i32
    return %arg0, %c0_i32, %c0_i32_0 : i32, i32, i32
  }
}

</mosaic_0001>

<llo_original>
// kernel: tpu_custom_call.1
$region0: #{tpu_custom_call.1}
  #allocation0 [shape = 'u32[]', space=smem, size = 0x4, offset = 0x4, fixed_abs, tag = 'smem constant byte address 0x4 - core index']
  #allocation1 [shape = 'u32[72,128]{1,0:T(1,128)}', space=vmem, size = 0x9000, scoped, tag = 'internal scratch']
  %s0 = inlined_call_operand.vmem [shape: f32[8,32], index: 0, kind: input, shape index: {}]
  %s1 = inlined_call_operand.vmem [shape: s32[8,1], index: 1, kind: input, shape index: {}]
  %s2 = inlined_call_operand.hbm [shape: f32[1,1,1], index: 2, kind: output, shape index: {}]
  %s3 = sld [smem:[#allocation0]]
  $region18: #{tpu_custom_call.1} parent=0
    _
  %s5 = ssub.s32 1, %s3
  %s6 = scalar_select 0, %s5, %s3
  $region1: #{tpu_custom_call.1} parent=0
    #allocation2 [shape = 'u8[512]{0}', space=vmem, size = 0x400, scoped, tag = 'output window, operand 0, single buffered']
    #allocation3 [shape = 's32[1]{0}', space=sflag, size = 0x4, scoped, tag = 'scoped memory for tpu_custom_call.1']
    %7 = vsyncpa [#allocation3], 0
    // Predicated region
    $region2: #{tpu_custom_call.1} parent=1 // pred_check
      _
    $region3: #{tpu_custom_call.1} parent=1 // pred_check_branch
      %9 = sbr.rel (0) target = $region5
    $region4: #{tpu_custom_call.1} parent=1 // pred_region
      _
    $region5: #{tpu_custom_call.1} parent=1 // pred_fallthru
      _
    // Predicated region
    $region6: #{tpu_custom_call.1} parent=1 // pred_check
      _
    $region7: #{tpu_custom_call.1} parent=1 // pred_check_branch
      %11 = sbr.rel (0) target = $region9
    $region8: #{tpu_custom_call.1} parent=1 // pred_region
      _
    $region9: #{tpu_custom_call.1} parent=1 // pred_fallthru
      _
    %v12 = vld [vmem:[%s0] sm:$0xff]
    %v13 = vld [vmem:[%s1] sm:$0xff]
    %v14 = vlaneseq
    %v15 = vand.u32 %v14, 127
    %16 = vset.pattern.permute.xlu0 0
    %17 = vperm.xlu0 %16, %v13
    %v18 = vpop.permute.xlu0 %17
    %vm19 = vcmp.eq.s32.totalorder %v15, %v18
    %v20 = vsel %vm19, 1, 0
    %v21 = vcvt.s32.f32 %v20
    %vm22 = vcmask 261120
    %v23 = vsel %vm22, %v12, -inf
    %24 = vmax.xlane.f32.xlu0 %v23
    %v25 = vpop.xlane.xlu0 %24
    %v26 = vsub.f32 %v12, %v25
    %v27 = vmul.f32 %v26, 1.442695
    %v28 = vpow.pop %v27
    %v29 = vsel %vm22, %v28, 0.0
    %30 = vadd.xlane.f32.xlu0 %v29
    %v31 = vpop.xlane.xlu0 %30
    %v32 = vmul.f32 %v26, %v21
    %v33 = vsel %vm22, %v32, 0.0
    %34 = vadd.xlane.f32.xlu0 %v33
    %v35 = vpop.xlane.xlu0 %34
    %v36 = vlog2.pop %v31
    %v37 = vmul.f32 %v36, 0.6931472
    %v38 = vsub.f32 %v37, %v35
    %v39 = vsub.f32 0.0, %v38
    %v40 = vmul.f32 %v39, 1.442695
    %v41 = vpow.pop %v40
    %v42 = vsub.f32 1.0, %v41
    %v43 = vmul.f32 %v42, %v42
    %v44 = vmul.f32 %v43, %v42
    %v45 = vmul.f32 %v44, 2.0
    %v46 = vmul.f32 %v45, %v38
    %s47 = smul.u32 0, 8
    %v48 = vlaneseq
    %v49 = vshrl.u32 %v48, 7
    %v50 = vstv %s47
    %v51 = vadd.s32 %v49, %v50
    %vm52 = vcmp.lt.s32.totalorder %v51, 8
    %v53 = vsel %vm52, %v46, 0.0
    %vm54 = vcmask 7168
    %v55 = vsel %vm54, %v53, 0.0
    %56 = vadd.xlane.f32.xlu0 %v55
    %v57 = vpop.xlane.xlu0 %56
    %v58 = vrot.slane %v57, 4
    %v59 = vadd.f32 %v57, %v58
    %v60 = vrot.slane %v59, 2
    %v61 = vadd.f32 %v59, %v60
    %v62 = vrot.slane %v61, 1
    %v63 = vadd.f32 %v61, %v62
    %s64 = vtos %v63
    %v65 = vstv %s64
    %vm66 = vcmask 0
    %67 = vst.msk [vmem:[#allocation2] sm:$0x1] %vm66, %v65
    // Predicated region
    $region10: #{tpu_custom_call.1} parent=1 // pred_check
      _
    $region11: #{tpu_custom_call.1} parent=1 // pred_check_branch
      %69 = sbr.rel (0) target = $region13
    $region12: #{tpu_custom_call.1} parent=1 // pred_region
      %71 = vsyncadd [#allocation3], 0
      %s73 = sshll.u32 [#allocation2], 4
      %s74 = int_to_ptr.vmem [resolvable:$true] %s73
      %s75 = sshll.u32 %s2, 4
      %s76 = int_to_ptr.hbm [resolvable:$true] %s75
      %78 = dma.vmem_to_hbm [thread:$0]  %s74, 16, %s76, [#allocation3]
    $region13: #{tpu_custom_call.1} parent=1 // pred_fallthru
      _
    // Predicated region
    $region14: #{tpu_custom_call.1} parent=1 // pred_check
      _
    $region15: #{tpu_custom_call.1} parent=1 // pred_check_branch
      %80 = sbr.rel (0) target = $region17
    $region16: #{tpu_custom_call.1} parent=1 // pred_region
      %82 = dma.done [#allocation3], 16
    $region17: #{tpu_custom_call.1} parent=1 // pred_fallthru
      _
    %83 = vsyncpa [#allocation3], 1

</llo_original>
